<compile_context>
chip_gen: v6e
topology: v6e:2x2x1
jax: 0.10.0
libtpu: 0.0.40
codegen_flags: <defaults>
</compile_context>

<pallas_src>
import numpy as np
import jax
import jax.numpy as jnp
from jax.experimental import pallas as pl
from jax.experimental.pallas import tpu as pltpu

ALPHA_SPATIAL = 0.1
ALPHA_PRESERVATION = 0.15
ALPHA_PHYSICS = 0.05


def _round_up(x, m):
    return -(-x // m) * m


def _pick_t_tile(n_stations, n_timepoints, itemsize, num_cores,
                 target_block_bytes=1 << 20, vmem_budget_bytes=24 << 20):
    """Pick a lane-aligned time tile: ~1 MiB per pred/targ DMA, VMEM-bounded."""
    # ~1 MiB per streamed block
    t = max(128, (target_block_bytes // max(1, n_stations * itemsize)) // 128 * 128)
    # no point making a tile longer than one core's share of the time axis
    per_core = _round_up(-(-n_timepoints // max(1, num_cores)), 128)
    t = min(t, max(128, per_core))
    # keep 2 inputs x 2 pipeline buffers + the f32 accumulator inside budget
    bytes_per_t = n_stations * (4 * itemsize + 4)
    t_max = max(128, (vmem_budget_bytes // bytes_per_t) // 128 * 128)
    return max(128, min(t, t_max))


# --------------------------------------------------------------------------
# Kernel A: streaming sum((pred - targ)^2), split across cores on a parallel
# grid axis, accumulated into a full-block f32 VMEM vector accumulator.
# --------------------------------------------------------------------------
def _make_mse_kernel(n_stations, n_timepoints, t_tile, tiles_per_core,
                     needs_mask):
    def kernel(pred_ref, targ_ref, out_ref, acc_ref):
        c = pl.program_id(0)
        t = pl.program_id(1)

        @pl.when(t == 0)
        def _init():
            acc_ref[...] = jnp.zeros_like(acc_ref)

        # native-dtype tiles upcast in-register (bf16 streaming halves HBM bytes)
        diff = (pred_ref[...].astype(jnp.float32)
                - targ_ref[...].astype(jnp.float32))
        if needs_mask:
            # mask the ragged tail (and any fully-padded trailing tiles) using
            # the *logical* time offset of this grid step.
            t_start = (c * tiles_per_core + t) * t_tile
            col = jax.lax.broadcasted_iota(jnp.int32, (n_stations, t_tile), 1)
            diff = jnp.where(t_start + col < n_timepoints, diff, 0.0)

        # element-wise vector accumulator: pure VPU work per step,
        # no per-step XLU tree reduce, no loop-carried scalar SMEM RMW.
        acc_ref[...] += diff * diff

        @pl.when(t == tiles_per_core - 1)
        def _finalize():
            s = jnp.sum(acc_ref[...])          # one cross-lane reduce per core
            sub = jax.lax.broadcasted_iota(jnp.int32, (1, 8, 128), 1)
            lane = jax.lax.broadcasted_iota(jnp.int32, (1, 8, 128), 2)
            out_ref[...] = jnp.where((sub == 0) & (lane == 0), s, 0.0)

    return kernel


# --------------------------------------------------------------------------
# Kernel B: tiny single-step kernel combining the per-core MSE partial sums
# with the per-station regularization terms.
# --------------------------------------------------------------------------
def _make_combine_kernel(n_stations, n_timepoints):
    inv_mse_count = 1.0 / float(n_stations * n_timepoints)
    inv_hybrid = 1.0 / float(n_stations * 3)

    def kernel(partials_ref, amp_t_ref, m_t_ref, sw_ref, per_ref, out_ref):
        # primary MSE from per-core partial sums (unwritten lanes are zero)
        primary = jnp.sum(partials_ref[...]) * inv_mse_count

        amp_t = amp_t_ref[...].astype(jnp.float32)      # (3, N) lane-dense
        m_t = m_t_ref[...].astype(jnp.float32)          # (N, N) = (I - W)^T
        sw = sw_ref[...].astype(jnp.float32)            # (1, N)

        # hybrid consistency: sum(((I - W) @ amp)^2) via one MXU matmul
        d = jnp.dot(amp_t, m_t, preferred_element_type=jnp.float32)   # (3, N)
        consistency = jnp.sum(d * d)

        abs_sw = jnp.abs(sw)                            # shared by both relus
        emd_pres = jnp.mean(jnp.maximum(abs_sw - 0.3, 0.0))
        spatial_mixing = jnp.mean(jnp.maximum(abs_sw - 0.2, 0.0))
        hybrid = (emd_pres + consistency) * inv_hybrid

        # EMD preservation loss
        energy = jnp.sum(amp_t * amp_t, axis=0, keepdims=True)        # (1, N)
        residual_penalty = jnp.mean(jnp.maximum(energy - 100.0, 0.0))
        preservation = spatial_mixing + residual_penalty * 0.1

        # physics regularization
        p0 = per_ref[0]
        p1 = per_ref[1]
        p2 = per_ref[2]
        period_sep = (jnp.maximum(20.0 - jnp.abs(p0 - p1), 0.0)
                      + jnp.maximum(20.0 - jnp.abs(p0 - p2), 0.0)
                      + jnp.maximum(20.0 - jnp.abs(p1 - p2), 0.0))
        amp_sum = jnp.sum(amp_t, axis=0, keepdims=True)               # (1, N)
        amplitude_penalty = jnp.mean(jnp.maximum(amp_sum - 30.0, 0.0))
        physics = period_sep + amplitude_penalty

        total = (primary
                 + ALPHA_SPATIAL * hybrid
                 + ALPHA_PRESERVATION * preservation
                 + ALPHA_PHYSICS * physics)

        out_ref[0] = total
        out_ref[1] = primary
        out_ref[2] = hybrid
        out_ref[3] = preservation
        out_ref[4] = physics

    return kernel


def emd_hybrid_loss(predicted, target, residual_amplitudes, residual_periods,
                    emd_spatial_weights, neighbor_weight_matrix, *,
                    t_tile=None, num_cores=2):
    """Pallas implementation of EMDHybridLoss.forward.

    predicted/target may be any float dtype (bf16/f32); they are streamed in
    their native dtype and upcast inside the kernel.
    Returns (total_loss, components_dict) like the PyTorch module.
    """
    n_stations, n_timepoints = predicted.shape
    assert target.shape == predicted.shape
    itemsize = np.dtype(predicted.dtype).itemsize

    if t_tile is None:
        t_tile = _pick_t_tile(n_stations, n_timepoints, itemsize, num_cores)
    else:
        t_tile = max(128, (int(t_tile) // 128) * 128)

    n_blocks = -(-n_timepoints // t_tile)
    num_cores = max(1, min(int(num_cores), n_blocks))
    tiles_per_core = -(-n_blocks // num_cores)
    needs_mask = (n_timepoints % t_tile != 0) or (tiles_per_core * num_cores != n_blocks)

    # explicit scoped-VMEM budget: 2 streams x 2 buffers + f32 accumulator
    vmem_need = (2 * 2 * n_stations * t_tile * itemsize
                 + n_stations * t_tile * 4
                 + 2 * 8 * 128 * 4)
    vmem_limit = int(min(max(vmem_need + (4 << 20), 16 << 20), 128 << 20))

    def stream_map(c, t):
        # clamp so trailing (masked) grid steps never fetch an OOB block
        return (0, jnp.minimum(c * tiles_per_core + t, n_blocks - 1))

    mse_kernel = _make_mse_kernel(n_stations, n_timepoints, t_tile,
                                  tiles_per_core, needs_mask)

    partials = pl.pallas_call(
        mse_kernel,
        out_shape=jax.ShapeDtypeStruct((num_cores, 8, 128), jnp.float32),
        grid_spec=pltpu.PrefetchScalarGridSpec(
            num_scalar_prefetch=0,
            grid=(num_cores, tiles_per_core),
            in_specs=[
                pl.BlockSpec((n_stations, t_tile), stream_map),   # predicted
                pl.BlockSpec((n_stations, t_tile), stream_map),   # target
            ],
            out_specs=pl.BlockSpec((1, 8, 128), lambda c, t: (c, 0, 0)),
            scratch_shapes=[pltpu.VMEM((n_stations, t_tile), jnp.float32)],
        ),
        compiler_params=pltpu.CompilerParams(
            dimension_semantics=("parallel", "arbitrary"),
            vmem_limit_bytes=vmem_limit),
        cost_estimate=pl.CostEstimate(
            flops=3 * n_stations * n_timepoints,
            transcendentals=0,
            bytes_accessed=2 * n_stations * n_timepoints * itemsize),
    )(predicted, target)

    # ---- tiny per-station terms + final combination (single-step kernel) ---
    # TODO(synk): for very large N where the dense (N,N) matrix stresses VMEM
    # (v7x 64 MiB), keep the sparse (N,k) neighbor form and gather via
    # scalar-prefetch indices or tile (I-W) over station rows.
    amp_t = jnp.asarray(residual_amplitudes, jnp.float32).T            # (3, N)
    m_t = (jnp.eye(n_stations, dtype=jnp.float32)
           - jnp.asarray(neighbor_weight_matrix, jnp.float32)).T       # (I-W)^T
    sw = jnp.asarray(emd_spatial_weights, jnp.float32).reshape(1, -1)  # (1, N)
    periods = jnp.asarray(residual_periods, jnp.float32)               # (3,)

    combine_kernel = _make_combine_kernel(n_stations, n_timepoints)

    out = pl.pallas_call(
        combine_kernel,
        out_shape=jax.ShapeDtypeStruct((5,), jnp.float32),
        grid_spec=pltpu.PrefetchScalarGridSpec(
            num_scalar_prefetch=0,
            grid=(1,),
            in_specs=[
                pl.BlockSpec((num_cores, 8, 128), lambda i: (0, 0, 0)),
                pl.BlockSpec((3, n_stations), lambda i: (0, 0)),
                pl.BlockSpec((n_stations, n_stations), lambda i: (0, 0)),
                pl.BlockSpec((1, n_stations), lambda i: (0, 0)),
                pl.BlockSpec(memory_space=pltpu.MemorySpace.SMEM),      # periods
            ],
            out_specs=pl.BlockSpec(memory_space=pltpu.MemorySpace.SMEM),
        ),
    )(partials, amp_t, m_t, sw, periods)

    total = out[0]
    components = {
        'primary': out[1],
        'spatial': out[2],
        'preservation': out[3],
        'physics': out[4],
    }
    return total, components


def build_neighbor_weight_matrix(coordinates, n_neighbors):
    """Mirror of EMDHybridInSARModel._build_neighbor_graph, folded into a
    dense (N, N) row-stochastic matrix."""
    coords = np.asarray(coordinates, dtype=np.float64)
    n = coords.shape[0]
    d = np.sqrt(((coords[:, None, :] - coords[None, :, :]) ** 2).sum(-1))
    order = np.argsort(d, axis=1)
    nbr_idx = order[:, 1:n_neighbors + 1]                       # drop self
    nbr_dist = np.take_along_axis(d, nbr_idx, axis=1)
    w = np.exp(-nbr_dist / np.mean(nbr_dist))
    w = w / (np.sum(w, axis=1, keepdims=True) + 1e-6)
    W = np.zeros((n, n), dtype=np.float32)
    rows = np.repeat(np.arange(n), n_neighbors)
    W[rows, nbr_idx.reshape(-1)] = w.reshape(-1).astype(np.float32)
    return W


def _reference_loss(predicted, target, amp, periods, sw, W):
    """Pure-JAX reference matching the PyTorch semantics, for verification."""
    n = amp.shape[0]
    primary = jnp.mean((predicted.astype(jnp.float32)
                        - target.astype(jnp.float32)) ** 2)
    nbr_mean = W @ amp
    consistency = jnp.sum((amp - nbr_mean) ** 2)
    emd_pres = jnp.mean(jax.nn.relu(jnp.abs(sw) - 0.3))
    hybrid = (emd_pres + consistency) / (n * 3)
    spatial_mixing = jnp.mean(jax.nn.relu(jnp.abs(sw) - 0.2))
    residual_penalty = jnp.mean(jax.nn.relu(jnp.sum(amp ** 2, axis=1) - 100.0))
    preservation = spatial_mixing + residual_penalty * 0.1
    sep = 0.0
    for i in range(3):
        for j in range(i + 1, 3):
            sep = sep + jax.nn.relu(20.0 - jnp.abs(periods[i] - periods[j]))
    amplitude_penalty = jnp.mean(jax.nn.relu(jnp.sum(amp, axis=1) - 30.0))
    physics = sep + amplitude_penalty
    total = (primary + ALPHA_SPATIAL * hybrid
             + ALPHA_PRESERVATION * preservation + ALPHA_PHYSICS * physics)
    return total, primary, hybrid, preservation, physics


if __name__ == "__main__":
    # Small synthetic problem consistent with the module's forward pass.
    n_stations = 16
    n_timepoints = 6000   # not a multiple of 128 -> exercises the masked tail
    n_neighbors = 8

    key = jax.random.PRNGKey(0)
    k1, k2, k3, k4, k5 = jax.random.split(key, 5)

    coordinates = np.asarray(jax.random.uniform(k1, (n_stations, 2)) * 100.0)
    predicted = jax.random.normal(k2, (n_stations, n_timepoints), jnp.float32) * 5.0
    target = jax.random.normal(k3, (n_stations, n_timepoints), jnp.float32) * 5.0

    # Deterministic "model parameters" (shapes from EMDHybridInSARModel.__init__),
    # lightly perturbed so the penalty branches are exercised.
    residual_amplitudes = (jnp.ones((n_stations, 3), jnp.float32) * 2.0
                           + jax.random.normal(k4, (n_stations, 3), jnp.float32) * 0.5)
    residual_periods = jnp.array([30.0, 45.0, 180.0], jnp.float32)
    emd_spatial_weights = (jnp.ones((n_stations,), jnp.float32) * 0.1
                           + jax.random.normal(k5, (n_stations,), jnp.float32) * 0.25)

    W = jnp.asarray(build_neighbor_weight_matrix(coordinates, n_neighbors))

    ref = _reference_loss(predicted, target, residual_amplitudes,
                          residual_periods, emd_spatial_weights, W)

    # Exercise both an explicit multi-tile pipelined path (ragged tail on the
    # second core chunk) and the auto tile-sizing path.
    for tt in (1024, None):
        total, comps = emd_hybrid_loss(predicted, target, residual_amplitudes,
                                       residual_periods, emd_spatial_weights, W,
                                       t_tile=tt)
        total = jax.block_until_ready(total)
        got = (total, comps['primary'], comps['spatial'],
               comps['preservation'], comps['physics'])
        for g, r in zip(got, ref):
            assert np.allclose(float(g), float(r), rtol=1e-4, atol=1e-5), \
                (tt, float(g), float(r))

    print("KERNEL_OK")
</pallas_src>

<mosaic_0001>
module attributes {stable_mosaic.version = 11 : i64} {
  func.func @kernel(%arg0: i32, %arg1: i32, %arg2: memref<16x1024xf32, #tpu.memory_space<vmem>>, %arg3: memref<16x1024xf32, #tpu.memory_space<vmem>>, %arg4: memref<1x8x128xf32, #tpu.memory_space<vmem>>, %arg5: memref<16x1024xf32, #tpu.memory_space<vmem>>) attributes {dimension_semantics = [#tpu.dimension_semantics<parallel>, #tpu.dimension_semantics<arbitrary>], iteration_bounds = array<i64: 2, 3>, scalar_prefetch = 0 : i64, scratch_operands = 1 : i64, tpu.core_type = #tpu.core_type<tc>, window_params = [{transform_indices = @transform_0, window_bounds = array<i64: 16, 1024>}, {transform_indices = @transform_1, window_bounds = array<i64: 16, 1024>}, {transform_indices = @transform_2, window_bounds = array<i64: 1, 8, 128>}]} {
    %c0_i32 = arith.constant 0 : i32
    %0 = arith.cmpi eq, %arg1, %c0_i32 : i32
    %1 = arith.extui %0 : i1 to i32
    %c0_i32_0 = arith.constant 0 : i32
    %2 = arith.cmpi ne, %1, %c0_i32_0 : i32
    scf.if %2 {
      %cst_9 = arith.constant 0.000000e+00 : f32
      %23 = vector.broadcast %cst_9 : f32 to vector<16x1024xf32>
      %c0_10 = arith.constant 0 : index
      %c0_11 = arith.constant 0 : index
      %24 = vector.load %arg5[%c0_10, %c0_11] : memref<16x1024xf32, #tpu.memory_space<vmem>>, vector<16x1024xf32>
      tpu.vector_store %arg5[%c0_10, %c0_11], %23 {strides = array<i32>} : memref<16x1024xf32, #tpu.memory_space<vmem>>, vector<16x1024xf32>,
    } else {
    }
    %c0 = arith.constant 0 : index
    %c0_1 = arith.constant 0 : index
    %3 = vector.load %arg2[%c0, %c0_1] : memref<16x1024xf32, #tpu.memory_space<vmem>>, vector<16x1024xf32>
    %c0_2 = arith.constant 0 : index
    %c0_3 = arith.constant 0 : index
    %4 = vector.load %arg3[%c0_2, %c0_3] : memref<16x1024xf32, #tpu.memory_space<vmem>>, vector<16x1024xf32>
    %5 = arith.subf %3, %4 : vector<16x1024xf32>
    %c3_i32 = arith.constant 3 : i32
    %6 = arith.muli %arg0, %c3_i32 : i32
    %7 = arith.addi %6, %arg1 : i32
    %c1024_i32 = arith.constant 1024 : i32
    %8 = arith.muli %7, %c1024_i32 : i32
    %9 = tpu.iota {dimensions = array<i32: 1>} : vector<16x1024xi32>
    %10 = vector.broadcast %8 : i32 to vector<16x1024xi32>
    %11 = arith.addi %10, %9 : vector<16x1024xi32>
    %c6000_i32 = arith.constant 6000 : i32
    %12 = vector.broadcast %c6000_i32 : i32 to vector<16x1024xi32>
    %13 = arith.cmpi slt, %11, %12 : vector<16x1024xi32>
    %cst = arith.constant 0.000000e+00 : f32
    %14 = vector.broadcast %cst : f32 to vector<16x1024xf32>
    %15 = arith.select %13, %5, %14 : vector<16x1024xi1>, vector<16x1024xf32>
    %c0_4 = arith.constant 0 : index
    %c0_5 = arith.constant 0 : index
    %16 = vector.load %arg5[%c0_4, %c0_5] : memref<16x1024xf32, #tpu.memory_space<vmem>>, vector<16x1024xf32>
    %17 = arith.mulf %15, %15 : vector<16x1024xf32>
    %18 = arith.addf %16, %17 : vector<16x1024xf32>
    %c0_6 = arith.constant 0 : index
    %c0_7 = arith.constant 0 : index
    %19 = vector.load %arg5[%c0_6, %c0_7] : memref<16x1024xf32, #tpu.memory_space<vmem>>, vector<16x1024xf32>
    tpu.vector_store %arg5[%c0_6, %c0_7], %18 {strides = array<i32>} : memref<16x1024xf32, #tpu.memory_space<vmem>>, vector<16x1024xf32>,
    %c2_i32 = arith.constant 2 : i32
    %20 = arith.cmpi eq, %arg1, %c2_i32 : i32
    %21 = arith.extui %20 : i1 to i32
    %c0_i32_8 = arith.constant 0 : i32
    %22 = arith.cmpi ne, %21, %c0_i32_8 : i32
    scf.if %22 {
      %c0_9 = arith.constant 0 : index
      %c0_10 = arith.constant 0 : index
      %23 = vector.load %arg5[%c0_9, %c0_10] : memref<16x1024xf32, #tpu.memory_space<vmem>>, vector<16x1024xf32>
      %24 = vector.shape_cast %23 : vector<16x1024xf32> to vector<1x16x1024xf32>
      %cst_11 = arith.constant dense<0.000000e+00> : vector<1xf32>
      %25 = vector.multi_reduction <add>, %24, %cst_11 [1, 2] : vector<1x16x1024xf32> to vector<1xf32>
      %26 = vector.shape_cast %25 : vector<1xf32> to vector<1x1x1xf32>
      %27 = vector.extract %26[0, 0, 0] : f32 from vector<1x1x1xf32>
      %28 = tpu.iota {dimensions = array<i32: 1>} : vector<1x8x128xi32>
      %29 = tpu.iota {dimensions = array<i32: 2>} : vector<1x8x128xi32>
      %c0_i32_12 = arith.constant 0 : i32
      %30 = vector.broadcast %c0_i32_12 : i32 to vector<1x8x128xi32>
      %31 = arith.cmpi eq, %28, %30 : vector<1x8x128xi32>
      %c0_i32_13 = arith.constant 0 : i32
      %32 = vector.broadcast %c0_i32_13 : i32 to vector<1x8x128xi32>
      %33 = arith.cmpi eq, %29, %32 : vector<1x8x128xi32>
      %34 = arith.andi %31, %33 : vector<1x8x128xi1>
      %cst_14 = arith.constant 0.000000e+00 : f32
      %35 = vector.broadcast %27 : f32 to vector<1x8x128xf32>
      %36 = vector.broadcast %cst_14 : f32 to vector<1x8x128xf32>
      %37 = arith.select %34, %35, %36 : vector<1x8x128xi1>, vector<1x8x128xf32>
      %c0_15 = arith.constant 0 : index
      %c0_16 = arith.constant 0 : index
      %c0_17 = arith.constant 0 : index
      %38 = vector.load %arg4[%c0_15, %c0_16, %c0_17] : memref<1x8x128xf32, #tpu.memory_space<vmem>>, vector<1x8x128xf32>
      tpu.vector_store %arg4[%c0_15, %c0_16, %c0_17], %37 {strides = array<i32>} : memref<1x8x128xf32, #tpu.memory_space<vmem>>, vector<1x8x128xf32>,
    } else {
    }
    return
  }
  func.func @transform_0(%arg0: i32, %arg1: i32) -> (i32, i32) {
    %c3_i32 = arith.constant 3 : i32
    %0 = arith.muli %arg0, %c3_i32 : i32
    %1 = arith.addi %0, %arg1 : i32
    %c5_i32 = arith.constant 5 : i32
    %2 = arith.minsi %1, %c5_i32 : i32
    %c0_i32 = arith.constant 0 : i32
    %c0_i32_0 = arith.constant 0 : i32
    return %c0_i32, %2 : i32, i32
  }
  func.func @transform_1(%arg0: i32, %arg1: i32) -> (i32, i32) {
    %c3_i32 = arith.constant 3 : i32
    %0 = arith.muli %arg0, %c3_i32 : i32
    %1 = arith.addi %0, %arg1 : i32
    %c5_i32 = arith.constant 5 : i32
    %2 = arith.minsi %1, %c5_i32 : i32
    %c0_i32 = arith.constant 0 : i32
    %c0_i32_0 = arith.constant 0 : i32
    return %c0_i32, %2 : i32, i32
  }
  func.func @transform_2(%arg0: i32, %arg1: i32) -> (i32, i32, i32) {
    %c0_i32 = arith.constant 0 : i32
    %c0_i32_0 = arith.constant 0 : i32
    %c0_i32_1 = arith.constant 0 : i32
    return %arg0, %c0_i32, %c0_i32_0 : i32, i32, i32
  }
}

</mosaic_0001>

<llo_original>
// kernel: tpu_custom_call.1
$region0: #{tpu_custom_call.1}
  #allocation0 [shape = 'u32[]', space=smem, size = 0x4, offset = 0x4, fixed_abs, tag = 'smem constant byte address 0x4 - core index']
  #allocation1 [shape = 'u32[144,128]{1,0:T(1,128)}', space=vmem, size = 0x12000, scoped, tag = 'internal scratch']
  #allocation2 [shape = 'f32[16,1024]{1,0:T(8,128)}', space=vmem, size = 0x10000, scoped, tag = 'scratch operand']
  %s0 = inlined_call_operand.hbm [shape: f32[16,6000], index: 0, kind: input, shape index: {}]
  %s1 = inlined_call_operand.hbm [shape: f32[16,6000], index: 1, kind: input, shape index: {}]
  %s2 = inlined_call_operand.hbm [shape: f32[2,8,128], index: 2, kind: output, shape index: {}]
  %s3 = sld [smem:[#allocation0]]
  $region57: #{tpu_custom_call.1} parent=0
    _
  %s5 = ssub.s32 1, %s3
  %s6 = scalar_select 0, %s5, %s3
  $region1: #{tpu_custom_call.1} parent=0
    #allocation3 [shape = 'u8[131072]{0}', space=vmem, size = 0x20000, scoped, tag = 'input window, operand 0']
    #allocation4 [shape = 's32[2]{0}', space=sflag, size = 0x8, scoped, tag = 'scoped memory for tpu_custom_call.1']
    #allocation5 [shape = 's32[2]{0}', space=sflag, size = 0x8, scoped, tag = 'scoped memory for tpu_custom_call.1']
    #allocation6 [shape = 'u8[131072]{0}', space=vmem, size = 0x20000, scoped, tag = 'input window, operand 1']
    #allocation7 [shape = 's32[2]{0}', space=sflag, size = 0x8, scoped, tag = 'scoped memory for tpu_custom_call.1']
    #allocation8 [shape = 'u8[8192]{0}', space=vmem, size = 0x2000, scoped, tag = 'output window, operand 0']
    %7 = vsyncpa [#allocation4], 0
    %s8 = scalar_lea.sflag [#allocation4], 1
    %9 = vsyncpa %s8, 0
    %10 = vsyncpa [#allocation7], 0
    %s11 = scalar_lea.sflag [#allocation7], 1
    %12 = vsyncpa %s11, 0
    %13 = vsyncpa [#allocation5], 0
    %s14 = scalar_lea.sflag [#allocation5], 1
    %15 = vsyncpa %s14, 0
    loop: start=0, step=1, limit=8
    $region2: #{tpu_custom_call.1} parent=1 // loop_pre_header
      _
    $region3: #{tpu_custom_call.1} parent=1 // loop_header
      %s17 = sphi 0, %s21
      %p18 = scmp.ge.s32.totalorder %s17, 8
      %s24 = sphi 0, %s36
      %s25 = sphi 0, %s32
      %s26 = sphi 0, %s24
      %s27 = sphi 0, %s25
      %s28 = sphi 0, %s26
      %s29 = sphi 0, %s27
      %s47 = sphi 0, %s49
      %s50 = sphi 0, %s47
      %s51 = sphi 0, %s50
      %s67 = sphi 0, %s51
      %s81 = sphi 0, %s83
      %s84 = sphi 0, %s81
      %s85 = sphi 0, %s84
      %s101 = sphi 0, %s85
      %s107 = sphi 0, %s109
      %s110 = sphi 0, %s107
      %s111 = sphi 0, %s110
      %s127 = sphi 0, %s111
    $region4: #{tpu_custom_call.1} parent=1 // loop_header_branch
      %20 = sbr.rel (%p18) target = $region8
    $region5: #{tpu_custom_call.1} parent=1 // loop_body
      %s22 = ssub.s32 %s17, 1
      %s23 = ssub.s32 %s17, 2
      %s30 = sadd.s32 1, %s25
      %p31 = scmp.ge.s32.totalorder %s30, 3
      %s32 = scalar_select %p31, 0, %s30
      %s33 = sadd.s32 1, %s24
      %s34 = scalar_select %p31, %s33, %s24
      %p35 = scmp.ge.s32.totalorder %s34, 2
      %s36 = scalar_select %p35, 0, %s34
      %s37 = smul.u32 %s24, 3
      %s38 = sadd.s32 %s37, %s25
      %p39 = scmp.lt.s32.totalorder %s38, 5
      %s40 = scalar_select %p39, %s38, 5
      %s41 = smul.u32 %s36, 3
      %s42 = sadd.s32 %s41, %s32
      %p43 = scmp.lt.s32.totalorder %s42, 5
      %s44 = scalar_select %p43, %s42, 5
      %s45 = ssub.s32 %s40, %s44
      %p46 = scmp.eq.s32.totalorder %s45, 0
      %s48 = sadd.s32 %s47, 1
      %s49 = scalar_select %p46, %s47, %s48
      %p52 = pneg %p46
      %p53 = scmp.eq.s32.totalorder %s17, 5
      %p54 = por %p52, %p53
      %p55 = scmp.ne.s32.totalorder %s47, %s50
      %p56 = scmp.eq.s32.totalorder %s17, 0
      %p57 = por %p55, %p56
      %p58 = scmp.ne.s32.totalorder %s47, %s50
      %p59 = scmp.eq.s32.totalorder %s22, 5
      %p60 = por %p58, %p59
      %p61 = scmp.ne.s32.totalorder %s50, %s51
      %p62 = scmp.eq.s32.totalorder %s22, 0
      %p63 = por %p61, %p62
      %p64 = scmp.ne.s32.totalorder %s50, %s51
      %p65 = scmp.eq.s32.totalorder %s23, 5
      %p66 = por %p64, %p65
      %p68 = scmp.ne.s32.totalorder %s51, %s67
      %p69 = scmp.eq.s32.totalorder %s23, 0
      %p70 = por %p68, %p69
      %s71 = smul.u32 %s24, 3
      %s72 = sadd.s32 %s71, %s25
      %p73 = scmp.lt.s32.totalorder %s72, 5
      %s74 = scalar_select %p73, %s72, 5
      %s75 = smul.u32 %s36, 3
      %s76 = sadd.s32 %s75, %s32
      %p77 = scmp.lt.s32.totalorder %s76, 5
      %s78 = scalar_select %p77, %s76, 5
      %s79 = ssub.s32 %s74, %s78
      %p80 = scmp.eq.s32.totalorder %s79, 0
      %s82 = sadd.s32 %s81, 1
      %s83 = scalar_select %p80, %s81, %s82
      %p86 = pneg %p80
      %p87 = scmp.eq.s32.totalorder %s17, 5
      %p88 = por %p86, %p87
      %p89 = scmp.ne.s32.totalorder %s81, %s84
      %p90 = scmp.eq.s32.totalorder %s17, 0
      %p91 = por %p89, %p90
      %p92 = scmp.ne.s32.totalorder %s81, %s84
      %p93 = scmp.eq.s32.totalorder %s22, 5
      %p94 = por %p92, %p93
      %p95 = scmp.ne.s32.totalorder %s84, %s85
      %p96 = scmp.eq.s32.totalorder %s22, 0
      %p97 = por %p95, %p96
      %p98 = scmp.ne.s32.totalorder %s84, %s85
      %p99 = scmp.eq.s32.totalorder %s23, 5
      %p100 = por %p98, %p99
      %p102 = scmp.ne.s32.totalorder %s85, %s101
      %p103 = scmp.eq.s32.totalorder %s23, 0
      %p104 = por %p102, %p103
      %s105 = ssub.s32 %s24, %s36
      %p106 = scmp.eq.s32.totalorder %s105, 0
      %s108 = sadd.s32 %s107, 1
      %s109 = scalar_select %p106, %s107, %s108
      %p112 = pneg %p106
      %p113 = scmp.eq.s32.totalorder %s17, 5
      %p114 = por %p112, %p113
      %p115 = scmp.ne.s32.totalorder %s107, %s110
      %p116 = scmp.eq.s32.totalorder %s17, 0
      %p117 = por %p115, %p116
      %p118 = scmp.ne.s32.totalorder %s107, %s110
      %p119 = scmp.eq.s32.totalorder %s22, 5
      %p120 = por %p118, %p119
      %p121 = scmp.ne.s32.totalorder %s110, %s111
      %p122 = scmp.eq.s32.totalorder %s22, 0
      %p123 = por %p121, %p122
      %p124 = scmp.ne.s32.totalorder %s110, %s111
      %p125 = scmp.eq.s32.totalorder %s23, 5
      %p126 = por %p124, %p125
      %p128 = scmp.ne.s32.totalorder %s111, %s127
      %p129 = scmp.eq.s32.totalorder %s23, 0
      %p130 = por %p128, %p129
      %p131 = scmp.le.s32.totalorder 1, %s17
      %p132 = scmp.lt.s32.totalorder %s17, 7
      %p133 = pnand %p131, %p132
      %p134 = pneg %p133
      // Predicated region
      $region9: #{tpu_custom_call.1} parent=5 // pred_check
        _
      $region10: #{tpu_custom_call.1} parent=5 // pred_check_branch
        %136 = sbr.rel (%p133) target = $region12
      $region11: #{tpu_custom_call.1} parent=5 // pred_region
        %s137 = ssub.s32 %s17, 1
      $region12: #{tpu_custom_call.1} parent=5 // pred_fallthru
        _
      %p138 = scmp.lt.s32.totalorder %s17, 6
      // Predicated region
      $region13: #{tpu_custom_call.1} parent=5 // pred_check
        %p139 = pneg %p138
      $region14: #{tpu_custom_call.1} parent=5 // pred_check_branch
        %141 = sbr.rel (%p139) target = $region16
      $region15: #{tpu_custom_call.1} parent=5 // pred_region
        // Predicated region
        $region17: #{tpu_custom_call.1} parent=15 // pred_check
          %p142 = pneg %p57
        $region18: #{tpu_custom_call.1} parent=15 // pred_check_branch
          %144 = sbr.rel (%p142) target = $region20
        $region19: #{tpu_custom_call.1} parent=15 // pred_region
          %s145 = sand.u32 %s47, 1
          %s146 = scalar_lea.sflag [#allocation4], %s145
          %s147 = sand.u32 %s47, 1
          %s148 = smul.addr %s147, 128
          %s149 = scalar_lea.vmem [#allocation3], %s148
          %s150 = smul.u32 %s24, 3
          %s151 = sadd.s32 %s150, %s25
          %p152 = scmp.lt.s32.totalorder %s151, 5
          %s153 = scalar_select %p152, %s151, 5
          %s154 = smul.u32 8, %s153
          %s155 = ssub.s32 47, %s154
          %p156 = scmp.lt.s32.totalorder %s155, 8
          %s157 = scalar_select %p156, %s155, 8
          %s158 = smul.u32 256, %s157
          %s160 = ssub.s32 2048, %s158
          %161 = vsyncadd %s146, %s160
          %p162 = scmp.ne.s32.totalorder 0, %s158
          %s163 = smul.addr %s154, 128
          %s164 = scalar_lea.hbm %s0, %s163
          %s165 = smul.u32 %s157, 8
          %s166 = smul.u32 %s165, 2
          %s167 = sshll.u32 %s149, 4
          %s168 = int_to_ptr.vmem [resolvable:$true] %s167
          %s169 = sshll.u32 %s166, 4
          %173 = dma.hbm_to_vmem [thread:$0]  (%p162), %s164, %s169, %s168, %s146, 6016, 1024, %s165
        $region20: #{tpu_custom_call.1} parent=15 // pred_fallthru
          _
        // Predicated region
        $region21: #{tpu_custom_call.1} parent=15 // pred_check
          %p174 = pneg %p91
        $region22: #{tpu_custom_call.1} parent=15 // pred_check_branch
          %176 = sbr.rel (%p174) target = $region24
        $region23: #{tpu_custom_call.1} parent=15 // pred_region
          %s177 = sand.u32 %s81, 1
          %s178 = scalar_lea.sflag [#allocation7], %s177
          %s179 = sand.u32 %s81, 1
          %s180 = smul.addr %s179, 128
          %s181 = scalar_lea.vmem [#allocation6], %s180
          %s182 = smul.u32 %s24, 3
          %s183 = sadd.s32 %s182, %s25
          %p184 = scmp.lt.s32.totalorder %s183, 5
          %s185 = scalar_select %p184, %s183, 5
          %s186 = smul.u32 8, %s185
          %s187 = ssub.s32 47, %s186
          %p188 = scmp.lt.s32.totalorder %s187, 8
          %s189 = scalar_select %p188, %s187, 8
          %s190 = smul.u32 256, %s189
          %s192 = ssub.s32 2048, %s190
          %193 = vsyncadd %s178, %s192
          %p194 = scmp.ne.s32.totalorder 0, %s190
          %s195 = smul.addr %s186, 128
          %s196 = scalar_lea.hbm %s1, %s195
          %s197 = smul.u32 %s189, 8
          %s198 = smul.u32 %s197, 2
          %s199 = sshll.u32 %s181, 4
          %s200 = int_to_ptr.vmem [resolvable:$true] %s199
          %s201 = sshll.u32 %s198, 4
          %205 = dma.hbm_to_vmem [thread:$0]  (%p194), %s196, %s201, %s200, %s178, 6016, 1024, %s197
        $region24: #{tpu_custom_call.1} parent=15 // pred_fallthru
          _
      $region16: #{tpu_custom_call.1} parent=5 // pred_fallthru
        _
      %p206 = scmp.le.s32.totalorder 1, %s17
      %p207 = scmp.lt.s32.totalorder %s17, 7
      %p208 = pnand %p206, %p207
      %p209 = pneg %p208
      // Predicated region
      $region25: #{tpu_custom_call.1} parent=5 // pred_check
        _
      $region26: #{tpu_custom_call.1} parent=5 // pred_check_branch
        %211 = sbr.rel (%p208) target = $region28
      $region27: #{tpu_custom_call.1} parent=5 // pred_region
        %s212 = ssub.s32 %s17, 1
        %s213 = sand.u32 %s50, 1
        %s214 = scalar_lea.sflag [#allocation4], %s213
        %s215 = sand.u32 %s50, 1
        %s216 = smul.addr %s215, 128
        %s217 = scalar_lea.vmem [#allocation3], %s216
        // Predicated region
        $region29: #{tpu_custom_call.1} parent=27 // pred_check
          %p218 = pneg %p63
        $region30: #{tpu_custom_call.1} parent=27 // pred_check_branch
          %220 = sbr.rel (%p218) target = $region32
        $region31: #{tpu_custom_call.1} parent=27 // pred_region
          %221 = dma.done %s214, 2048
        $region32: #{tpu_custom_call.1} parent=27 // pred_fallthru
          _
        %s222 = sand.u32 %s84, 1
        %s223 = scalar_lea.sflag [#allocation7], %s222
        %s224 = sand.u32 %s84, 1
        %s225 = smul.addr %s224, 128
        %s226 = scalar_lea.vmem [#allocation6], %s225
        // Predicated region
        $region33: #{tpu_custom_call.1} parent=27 // pred_check
          %p227 = pneg %p97
        $region34: #{tpu_custom_call.1} parent=27 // pred_check_branch
          %229 = sbr.rel (%p227) target = $region36
        $region35: #{tpu_custom_call.1} parent=27 // pred_region
          %230 = dma.done %s223, 2048
        $region36: #{tpu_custom_call.1} parent=27 // pred_fallthru
          _
        %s231 = sand.u32 %s50, 1
        %s232 = scalar_lea.sflag [#allocation4], %s231
        %s233 = sand.u32 %s50, 1
        %s234 = smul.addr %s233, 128
        %s235 = scalar_lea.vmem [#allocation3], %s234
        %p236 = pneg %p63
        %p237 = pneg %p60
        %s238 = sand.u32 %s84, 1
        %s239 = scalar_lea.sflag [#allocation7], %s238
        %s240 = sand.u32 %s84, 1
        %s241 = smul.addr %s240, 128
        %s242 = scalar_lea.vmem [#allocation6], %s241
        %p243 = pneg %p97
        %p244 = pneg %p94
        %p245 = pneg %p123
        %p246 = pneg %p120
        %s247 = sand.u32 %s110, 1
        %s248 = scalar_lea.sflag [#allocation5], %s247
        %s249 = sand.u32 %s110, 1
        %s250 = smul.addr %s249, 8
        %s251 = scalar_lea.vmem [#allocation8], %s250
        %s252 = smul.u32 %s26, 3
        %s253 = sadd.s32 %s252, %s27
        %p254 = scmp.lt.s32.totalorder %s253, 5
        %s255 = scalar_select %p254, %s253, 5
        %s256 = smul.u32 8, %s255
        %s257 = ssub.s32 47, %s256
        %p258 = scmp.lt.s32.totalorder %s257, 8
        %s259 = scalar_select %p258, %s257, 8
        %s260 = smul.u32 256, %s259
        %s261 = smul.u32 %s26, 3
        %s262 = sadd.s32 %s261, %s27
        %p263 = scmp.lt.s32.totalorder %s262, 5
        %s264 = scalar_select %p263, %s262, 5
        %s265 = smul.u32 8, %s264
        %s266 = ssub.s32 47, %s265
        %p267 = scmp.lt.s32.totalorder %s266, 8
        %s268 = scalar_select %p267, %s266, 8
        %s269 = smul.u32 256, %s268
        %p270 = scmp.eq.s32.totalorder %s27, 0
        // Predicated region
        $region37: #{tpu_custom_call.1} parent=27 // pred_check
          %p271 = pneg %p270
        $region38: #{tpu_custom_call.1} parent=27 // pred_check_branch
          %273 = sbr.rel (%p271) target = $region40
        $region39: #{tpu_custom_call.1} parent=27 // pred_region
          %274 = vst [vmem:[#allocation2] sm:$0xff] 0.0
          %275 = vst [vmem:[#allocation2 + $0x8] sm:$0xff] 0.0
          %276 = vst [vmem:[#allocation2 + $0x10] sm:$0xff] 0.0
          %277 = vst [vmem:[#allocation2 + $0x18] sm:$0xff] 0.0
          %278 = vst [vmem:[#allocation2 + $0x20] sm:$0xff] 0.0
          %279 = vst [vmem:[#allocation2 + $0x28] sm:$0xff] 0.0
          %280 = vst [vmem:[#allocation2 + $0x30] sm:$0xff] 0.0
          %281 = vst [vmem:[#allocation2 + $0x38] sm:$0xff] 0.0
          %282 = vst [vmem:[#allocation2 + $0x40] sm:$0xff] 0.0
          %283 = vst [vmem:[#allocation2 + $0x48] sm:$0xff] 0.0
          %284 = vst [vmem:[#allocation2 + $0x50] sm:$0xff] 0.0
          %285 = vst [vmem:[#allocation2 + $0x58] sm:$0xff] 0.0
          %286 = vst [vmem:[#allocation2 + $0x60] sm:$0xff] 0.0
          %287 = vst [vmem:[#allocation2 + $0x68] sm:$0xff] 0.0
          %288 = vst [vmem:[#allocation2 + $0x70] sm:$0xff] 0.0
          %289 = vst [vmem:[#allocation2 + $0x78] sm:$0xff] 0.0
        $region40: #{tpu_custom_call.1} parent=27 // pred_fallthru
          _
        %v290 = vld [vmem:[%s217] sm:$0xff]
        %v291 = vld [vmem:[%s217 + $0x8] sm:$0xff]
        %v292 = vld [vmem:[%s217 + $0x10] sm:$0xff]
        %v293 = vld [vmem:[%s217 + $0x18] sm:$0xff]
        %v294 = vld [vmem:[%s217 + $0x20] sm:$0xff]
        %v295 = vld [vmem:[%s217 + $0x28] sm:$0xff]
        %v296 = vld [vmem:[%s217 + $0x30] sm:$0xff]
        %v297 = vld [vmem:[%s217 + $0x38] sm:$0xff]
        %v298 = vld [vmem:[%s217 + $0x40] sm:$0xff]
        %v299 = vld [vmem:[%s217 + $0x48] sm:$0xff]
        %v300 = vld [vmem:[%s217 + $0x50] sm:$0xff]
        %v301 = vld [vmem:[%s217 + $0x58] sm:$0xff]
        %v302 = vld [vmem:[%s217 + $0x60] sm:$0xff]
        %v303 = vld [vmem:[%s217 + $0x68] sm:$0xff]
        %v304 = vld [vmem:[%s217 + $0x70] sm:$0xff]
        %v305 = vld [vmem:[%s217 + $0x78] sm:$0xff]
        %v306 = vld [vmem:[%s226] sm:$0xff]
        %v307 = vld [vmem:[%s226 + $0x8] sm:$0xff]
        %v308 = vld [vmem:[%s226 + $0x10] sm:$0xff]
        %v309 = vld [vmem:[%s226 + $0x18] sm:$0xff]
        %v310 = vld [vmem:[%s226 + $0x20] sm:$0xff]
        %v311 = vld [vmem:[%s226 + $0x28] sm:$0xff]
        %v312 = vld [vmem:[%s226 + $0x30] sm:$0xff]
        %v313 = vld [vmem:[%s226 + $0x38] sm:$0xff]
        %v314 = vld [vmem:[%s226 + $0x40] sm:$0xff]
        %v315 = vld [vmem:[%s226 + $0x48] sm:$0xff]
        %v316 = vld [vmem:[%s226 + $0x50] sm:$0xff]
        %v317 = vld [vmem:[%s226 + $0x58] sm:$0xff]
        %v318 = vld [vmem:[%s226 + $0x60] sm:$0xff]
        %v319 = vld [vmem:[%s226 + $0x68] sm:$0xff]
        %v320 = vld [vmem:[%s226 + $0x70] sm:$0xff]
        %v321 = vld [vmem:[%s226 + $0x78] sm:$0xff]
        %v322 = vsub.f32 %v290, %v306
        %v323 = vsub.f32 %v291, %v307
        %v324 = vsub.f32 %v292, %v308
        %v325 = vsub.f32 %v293, %v309
        %v326 = vsub.f32 %v294, %v310
        %v327 = vsub.f32 %v295, %v311
        %v328 = vsub.f32 %v296, %v312
        %v329 = vsub.f32 %v297, %v313
        %v330 = vsub.f32 %v298, %v314
        %v331 = vsub.f32 %v299, %v315
        %v332 = vsub.f32 %v300, %v316
        %v333 = vsub.f32 %v301, %v317
        %v334 = vsub.f32 %v302, %v318
        %v335 = vsub.f32 %v303, %v319
        %v336 = vsub.f32 %v304, %v320
        %v337 = vsub.f32 %v305, %v321
        %s338 = smul.u32 %s26, 3
        %s339 = sadd.s32 %s338, %s27
        %s340 = smul.u32 %s339, 1024
        %v341 = vlaneseq
        %v342 = vand.u32 %v341, 127
        %v343 = vadd.s32 %v342, 128
        %v344 = vadd.s32 %v342, 256
        %v345 = vadd.s32 %v342, 384
        %v346 = vadd.s32 %v342, 512
        %v347 = vadd.s32 %v342, 640
        %v348 = vadd.s32 %v342, 768
        %v349 = vadd.s32 %v342, 896
        %v350 = vstv %s340
        %v351 = vadd.s32 %v350, %v342
        %v352 = vadd.s32 %v350, %v343
        %v353 = vadd.s32 %v350, %v344
        %v354 = vadd.s32 %v350, %v345
        %v355 = vadd.s32 %v350, %v346
        %v356 = vadd.s32 %v350, %v347
        %v357 = vadd.s32 %v350, %v348
        %v358 = vadd.s32 %v350, %v349
        %vm359 = vcmp.lt.s32.totalorder %v351, 6000
        %vm360 = vcmp.lt.s32.totalorder %v352, 6000
        %vm361 = vcmp.lt.s32.totalorder %v353, 6000
        %vm362 = vcmp.lt.s32.totalorder %v354, 6000
        %vm363 = vcmp.lt.s32.totalorder %v355, 6000
        %vm364 = vcmp.lt.s32.totalorder %v356, 6000
        %vm365 = vcmp.lt.s32.totalorder %v357, 6000
        %vm366 = vcmp.lt.s32.totalorder %v358, 6000
        %v367 = vsel %vm359, %v322, 0.0
        %v368 = vsel %vm360, %v323, 0.0
        %v369 = vsel %vm361, %v324, 0.0
        %v370 = vsel %vm362, %v325, 0.0
        %v371 = vsel %vm363, %v326, 0.0
        %v372 = vsel %vm364, %v327, 0.0
        %v373 = vsel %vm365, %v328, 0.0
        %v374 = vsel %vm366, %v329, 0.0
        %v375 = vsel %vm359, %v330, 0.0
        %v376 = vsel %vm360, %v331, 0.0
        %v377 = vsel %vm361, %v332, 0.0
        %v378 = vsel %vm362, %v333, 0.0
        %v379 = vsel %vm363, %v334, 0.0
        %v380 = vsel %vm364, %v335, 0.0
        %v381 = vsel %vm365, %v336, 0.0
        %v382 = vsel %vm366, %v337, 0.0
        %v383 = vld [vmem:[#allocation2] sm:$0xff]
        %v384 = vld [vmem:[#allocation2 + $0x8] sm:$0xff]
        %v385 = vld [vmem:[#allocation2 + $0x10] sm:$0xff]
        %v386 = vld [vmem:[#allocation2 + $0x18] sm:$0xff]
        %v387 = vld [vmem:[#allocation2 + $0x20] sm:$0xff]
        %v388 = vld [vmem:[#allocation2 + $0x28] sm:$0xff]
        %v389 = vld [vmem:[#allocation2 + $0x30] sm:$0xff]
        %v390 = vld [vmem:[#allocation2 + $0x38] sm:$0xff]
        %v391 = vld [vmem:[#allocation2 + $0x40] sm:$0xff]
        %v392 = vld [vmem:[#allocation2 + $0x48] sm:$0xff]
        %v393 = vld [vmem:[#allocation2 + $0x50] sm:$0xff]
        %v394 = vld [vmem:[#allocation2 + $0x58] sm:$0xff]
        %v395 = vld [vmem:[#allocation2 + $0x60] sm:$0xff]
        %v396 = vld [vmem:[#allocation2 + $0x68] sm:$0xff]
        %v397 = vld [vmem:[#allocation2 + $0x70] sm:$0xff]
        %v398 = vld [vmem:[#allocation2 + $0x78] sm:$0xff]
        %v399 = vmul.f32 %v367, %v367
        %v400 = vmul.f32 %v368, %v368
        %v401 = vmul.f32 %v369, %v369
        %v402 = vmul.f32 %v370, %v370
        %v403 = vmul.f32 %v371, %v371
        %v404 = vmul.f32 %v372, %v372
        %v405 = vmul.f32 %v373, %v373
        %v406 = vmul.f32 %v374, %v374
        %v407 = vmul.f32 %v375, %v375
        %v408 = vmul.f32 %v376, %v376
        %v409 = vmul.f32 %v377, %v377
        %v410 = vmul.f32 %v378, %v378
        %v411 = vmul.f32 %v379, %v379
        %v412 = vmul.f32 %v380, %v380
        %v413 = vmul.f32 %v381, %v381
        %v414 = vmul.f32 %v382, %v382
        %v415 = vadd.f32 %v383, %v399
        %v416 = vadd.f32 %v384, %v400
        %v417 = vadd.f32 %v385, %v401
        %v418 = vadd.f32 %v386, %v402
        %v419 = vadd.f32 %v387, %v403
        %v420 = vadd.f32 %v388, %v404
        %v421 = vadd.f32 %v389, %v405
        %v422 = vadd.f32 %v390, %v406
        %v423 = vadd.f32 %v391, %v407
        %v424 = vadd.f32 %v392, %v408
        %v425 = vadd.f32 %v393, %v409
        %v426 = vadd.f32 %v394, %v410
        %v427 = vadd.f32 %v395, %v411
        %v428 = vadd.f32 %v396, %v412
        %v429 = vadd.f32 %v397, %v413
        %v430 = vadd.f32 %v398, %v414
        %431 = vst [vmem:[#allocation2] sm:$0xff] %v415
        %432 = vst [vmem:[#allocation2 + $0x8] sm:$0xff] %v416
        %433 = vst [vmem:[#allocation2 + $0x10] sm:$0xff] %v417
        %434 = vst [vmem:[#allocation2 + $0x18] sm:$0xff] %v418
        %435 = vst [vmem:[#allocation2 + $0x20] sm:$0xff] %v419
        %436 = vst [vmem:[#allocation2 + $0x28] sm:$0xff] %v420
        %437 = vst [vmem:[#allocation2 + $0x30] sm:$0xff] %v421
        %438 = vst [vmem:[#allocation2 + $0x38] sm:$0xff] %v422
        %439 = vst [vmem:[#allocation2 + $0x40] sm:$0xff] %v423
        %440 = vst [vmem:[#allocation2 + $0x48] sm:$0xff] %v424
        %441 = vst [vmem:[#allocation2 + $0x50] sm:$0xff] %v425
        %442 = vst [vmem:[#allocation2 + $0x58] sm:$0xff] %v426
        %443 = vst [vmem:[#allocation2 + $0x60] sm:$0xff] %v427
        %444 = vst [vmem:[#allocation2 + $0x68] sm:$0xff] %v428
        %445 = vst [vmem:[#allocation2 + $0x70] sm:$0xff] %v429
        %446 = vst [vmem:[#allocation2 + $0x78] sm:$0xff] %v430
        %p447 = scmp.eq.s32.totalorder %s27, 2
        // Predicated region
        $region41: #{tpu_custom_call.1} parent=27 // pred_check
          %p448 = pneg %p447
        $region42: #{tpu_custom_call.1} parent=27 // pred_check_branch
          %450 = sbr.rel (%p448) target = $region44
        $region43: #{tpu_custom_call.1} parent=27 // pred_region
          %v451 = vld [vmem:[#allocation2] sm:$0xff]
          %v452 = vld [vmem:[#allocation2 + $0x8] sm:$0xff]
          %v453 = vld [vmem:[#allocation2 + $0x10] sm:$0xff]
          %v454 = vld [vmem:[#allocation2 + $0x18] sm:$0xff]
          %v455 = vld [vmem:[#allocation2 + $0x20] sm:$0xff]
          %v456 = vld [vmem:[#allocation2 + $0x28] sm:$0xff]
          %v457 = vld [vmem:[#allocation2 + $0x30] sm:$0xff]
          %v458 = vld [vmem:[#allocation2 + $0x38] sm:$0xff]
          %v459 = vld [vmem:[#allocation2 + $0x40] sm:$0xff]
          %v460 = vld [vmem:[#allocation2 + $0x48] sm:$0xff]
          %v461 = vld [vmem:[#allocation2 + $0x50] sm:$0xff]
          %v462 = vld [vmem:[#allocation2 + $0x58] sm:$0xff]
          %v463 = vld [vmem:[#allocation2 + $0x60] sm:$0xff]
          %v464 = vld [vmem:[#allocation2 + $0x68] sm:$0xff]
          %v465 = vld [vmem:[#allocation2 + $0x70] sm:$0xff]
          %v466 = vld [vmem:[#allocation2 + $0x78] sm:$0xff]
          %v467 = vadd.f32 %v451, %v452
          %v468 = vadd.f32 %v467, %v453
          %v469 = vadd.f32 %v468, %v454
          %v470 = vadd.f32 %v469, %v455
          %v471 = vadd.f32 %v470, %v456
          %v472 = vadd.f32 %v471, %v457
          %v473 = vadd.f32 %v472, %v458
          %v474 = vadd.f32 %v473, %v459
          %v475 = vadd.f32 %v474, %v460
          %v476 = vadd.f32 %v475, %v461
          %v477 = vadd.f32 %v476, %v462
          %v478 = vadd.f32 %v477, %v463
          %v479 = vadd.f32 %v478, %v464
          %v480 = vadd.f32 %v479, %v465
          %v481 = vadd.f32 %v480, %v466
          %482 = vadd.xlane.f32.xlu0 %v481
          %v483 = vpop.xlane.xlu0 %482
          %v484 = vrot.slane %v483, 4
          %v485 = vadd.f32 %v483, %v484
          %v486 = vrot.slane %v485, 2
          %v487 = vadd.f32 %v485, %v486
          %v488 = vrot.slane %v487, 1
          %v489 = vadd.f32 %v487, %v488
          %s490 = vtos %v489
          %v491 = vlaneseq
          %v492 = vshrl.u32 %v491, 7
          %vm493 = vcmp.eq.s32.totalorder %v492, 0
          %vm494 = vcmp.eq.s32.totalorder %v342, 0
          %vm495 = vmand %vm493, %vm494
          %v496 = vstv %s490
          %v497 = vsel %vm495, %v496, 0.0
          %498 = vst [vmem:[%s251] sm:$0xff] %v497
        $region44: #{tpu_custom_call.1} parent=27 // pred_fallthru
          _
        %s499 = sand.u32 %s110, 1
        %s500 = scalar_lea.sflag [#allocation5], %s499
        %s501 = sand.u32 %s110, 1
        %s502 = smul.addr %s501, 8
        %s503 = scalar_lea.vmem [#allocation8], %s502
        // Predicated region
        $region45: #{tpu_custom_call.1} parent=27 // pred_check
          %p504 = pneg %p120
        $region46: #{tpu_custom_call.1} parent=27 // pred_check_branch
          %506 = sbr.rel (%p504) target = $region48
        $region47: #{tpu_custom_call.1} parent=27 // pred_region
          %s508 = ssub.s32 128, 128
          %509 = vsyncadd %s500, %s508
          %s510 = smul.addr %s26, 128
          %s511 = scalar_lea.hbm %s2, %s510
          %s513 = sshll.u32 %s503, 4
          %s514 = int_to_ptr.vmem [resolvable:$true] %s513
          %516 = dma.vmem_to_hbm [thread:$0]  %s514, 128, %s511, %s500
        $region48: #{tpu_custom_call.1} parent=27 // pred_fallthru
          _
      $region28: #{tpu_custom_call.1} parent=5 // pred_fallthru
        _
      %p517 = scmp.le.s32.totalorder 2, %s17
      // Predicated region
      $region49: #{tpu_custom_call.1} parent=5 // pred_check
        %p518 = pneg %p517
      $region50: #{tpu_custom_call.1} parent=5 // pred_check_branch
        %520 = sbr.rel (%p518) target = $region52
      $region51: #{tpu_custom_call.1} parent=5 // pred_region
        %s521 = ssub.s32 %s17, 2
        // Predicated region
        $region53: #{tpu_custom_call.1} parent=51 // pred_check
          %p522 = pneg %p126
        $region54: #{tpu_custom_call.1} parent=51 // pred_check_branch
          %524 = sbr.rel (%p522) target = $region56
        $region55: #{tpu_custom_call.1} parent=51 // pred_region
          %s525 = sand.u32 %s111, 1
          %s526 = scalar_lea.sflag [#allocation5], %s525
          %s527 = sand.u32 %s111, 1
          %s528 = smul.addr %s527, 8
          %s529 = scalar_lea.vmem [#allocation8], %s528
          %530 = dma.done %s526, 128
        $region56: #{tpu_custom_call.1} parent=51 // pred_fallthru
          _
      $region52: #{tpu_custom_call.1} parent=5 // pred_fallthru
        _
    $region6: #{tpu_custom_call.1} parent=1 // loop_footer
      %s21 = sadd.s32 1, %s17
    $region7: #{tpu_custom_call.1} parent=1 // loop_footer_branch
      %16 = sbr.rel target = $region3
    $region8: #{tpu_custom_call.1} parent=1 // loop_exit
      _
    %531 = vsyncpa [#allocation4], 1
    %s532 = scalar_lea.sflag [#allocation4], 1
    %533 = vsyncpa %s532, 1
    %534 = vsyncpa [#allocation7], 1
    %s535 = scalar_lea.sflag [#allocation7], 1
    %536 = vsyncpa %s535, 1
    %537 = vsyncpa [#allocation5], 1
    %s538 = scalar_lea.sflag [#allocation5], 1
    %539 = vsyncpa %s538, 1

</llo_original>
